<compile_context>
chip_gen: v7x
topology: tpu7x:2x2x1
jax: 0.10.0
libtpu: 0.0.40
codegen_flags: <defaults>
</compile_context>

<pallas_src>
import numpy as np
import jax
import jax.numpy as jnp
from jax.experimental import pallas as pl
from jax.experimental.pallas import tpu as pltpu


# ----------------------------------------------------------------------------
# Kernel 1: fused 1x1 conv + folded BatchNorm (inference) + ReLU.
# Row-tiled; full (Cin, Cout) folded weight stays resident in VMEM.
# ----------------------------------------------------------------------------
def _conv1x1_bn_relu_kernel(x_ref, w_ref, b_ref, o_ref):
    acc = jnp.dot(x_ref[...], w_ref[...], preferred_element_type=jnp.float32)
    o_ref[...] = jnp.maximum(acc + b_ref[...], 0.0).astype(o_ref.dtype)


def conv1x1_bn_relu(x_flat, w, b, *, tm=1024, out_dtype=jnp.float32):
    """x_flat: (R, Cin) bf16, w: (Cin, Cout) bf16 [BN folded], b: (1, Cout) f32."""
    R, Cin = x_flat.shape
    Cout = w.shape[1]
    tm = min(tm, R)
    return pl.pallas_call(
        _conv1x1_bn_relu_kernel,
        out_shape=jax.ShapeDtypeStruct((R, Cout), out_dtype),
        grid_spec=pltpu.PrefetchScalarGridSpec(
            num_scalar_prefetch=0,
            grid=(pl.cdiv(R, tm),),
            in_specs=[
                pl.BlockSpec((tm, Cin), lambda i: (i, 0)),
                pl.BlockSpec((Cin, Cout), lambda i: (0, 0)),   # resident weight
                pl.BlockSpec((1, Cout), lambda i: (0, 0)),     # resident bias
            ],
            out_specs=pl.BlockSpec((tm, Cout), lambda i: (i, 0)),
        ),
        compiler_params=pltpu.CompilerParams(
            dimension_semantics=("parallel",)),
    )(x_flat, w, b)


# ----------------------------------------------------------------------------
# Kernel 2: separable bilinear upsample, H direction only.
# out[n] = Mh @ x[n], with x laid out as (N, Hin, Win*C) so C stays on lanes.
# ----------------------------------------------------------------------------
def _rows_matmul_kernel(m_ref, x_ref, o_ref):
    o_ref[0] = jnp.dot(m_ref[...], x_ref[0],
                       preferred_element_type=jnp.float32).astype(o_ref.dtype)


def h_upsample(x, m):
    """x: (N, Hin, L) bf16, m: (Hout, Hin) bf16 -> (N, Hout, L) bf16."""
    N, Hin, L = x.shape
    Hout = m.shape[0]
    return pl.pallas_call(
        _rows_matmul_kernel,
        out_shape=jax.ShapeDtypeStruct((N, Hout, L), jnp.bfloat16),
        grid_spec=pltpu.PrefetchScalarGridSpec(
            num_scalar_prefetch=0,
            grid=(N,),
            in_specs=[
                pl.BlockSpec((Hout, Hin), lambda n: (0, 0)),
                pl.BlockSpec((1, Hin, L), lambda n: (n, 0, 0)),
            ],
            out_specs=pl.BlockSpec((1, Hout, L), lambda n: (n, 0, 0)),
        ),
        compiler_params=pltpu.CompilerParams(
            dimension_semantics=("parallel",)),
    )(m, x)


# ----------------------------------------------------------------------------
# Kernel 3: fused W-direction upsample + feature products + 1x1 predict conv.
# pred = sum_c [ u5 * (wp5 + u4 * (wp45 + wp345 * o3)) ]_c + bp   (Horner, VPU)
# where u4/u5 are the W-upsampled (already H-upsampled) linear4/linear5 maps.
# ----------------------------------------------------------------------------
def _fused_w_upsample_predict_kernel(o3_ref, t4_ref, t5_ref, mw4_ref, mw5_ref,
                                     wp_ref, bp_ref, o_ref):
    th, W3, C = o3_ref.shape[1], o3_ref.shape[2], o3_ref.shape[3]
    W4 = t4_ref.shape[2]
    W5 = t5_ref.shape[2]

    # W-direction bilinear upsample: batched (over the th rows) MXU matmuls.
    u5 = jnp.einsum('rvw,rwc->rvc',
                    jnp.broadcast_to(mw5_ref[...], (th, W3, W5)), t5_ref[0],
                    preferred_element_type=jnp.float32)            # (th, W3, C)
    u4 = jnp.einsum('rvw,rwc->rvc',
                    jnp.broadcast_to(mw4_ref[...], (th, W3, W4)), t4_ref[0],
                    preferred_element_type=jnp.float32)            # (th, W3, C)

    o3 = o3_ref[0]                                                 # (th, W3, C) f32
    wp5 = wp_ref[0:1, :]                                           # (1, C)
    wp45 = wp_ref[1:2, :]
    wp345 = wp_ref[2:3, :]
    # predict conv over cat([u5, u4*u5, o3*u4*u5]) in Horner form (f32 VPU).
    horner = u5 * (wp5 + u4 * (wp45 + wp345 * o3))                 # (th, W3, C)
    o_ref[0] = jnp.sum(horner, axis=-1) + bp_ref[...]              # (th, W3)


def fused_w_upsample_predict(o3, t4, t5, mw4, mw5, wp_rows, bp, *, th=64):
    N, H3, W3, C = o3.shape
    W4 = t4.shape[2]
    W5 = t5.shape[2]
    th = min(th, H3)
    return pl.pallas_call(
        _fused_w_upsample_predict_kernel,
        out_shape=jax.ShapeDtypeStruct((N, H3, W3), jnp.float32),
        grid_spec=pltpu.PrefetchScalarGridSpec(
            num_scalar_prefetch=0,
            grid=(N, pl.cdiv(H3, th)),
            in_specs=[
                pl.BlockSpec((1, th, W3, C), lambda n, h: (n, h, 0, 0)),
                pl.BlockSpec((1, th, W4, C), lambda n, h: (n, h, 0, 0)),
                pl.BlockSpec((1, th, W5, C), lambda n, h: (n, h, 0, 0)),
                pl.BlockSpec((W3, W4), lambda n, h: (0, 0)),
                pl.BlockSpec((W3, W5), lambda n, h: (0, 0)),
                pl.BlockSpec((3, C), lambda n, h: (0, 0)),
                pl.BlockSpec((1, 1), lambda n, h: (0, 0)),
            ],
            out_specs=pl.BlockSpec((1, th, W3), lambda n, h: (n, h, 0)),
        ),
        compiler_params=pltpu.CompilerParams(
            dimension_semantics=("parallel", "parallel")),
    )(o3, t4, t5, mw4, mw5, wp_rows, bp)


# ----------------------------------------------------------------------------
# Host-side glue.
# ----------------------------------------------------------------------------
def interp_matrix_align_corners(in_size, out_size):
    """1-D linear interpolation matrix matching F.interpolate(align_corners=True)."""
    A = np.zeros((out_size, in_size), dtype=np.float32)
    if in_size == 1:
        A[:, 0] = 1.0
        return A
    if out_size == 1:
        A[0, 0] = 1.0
        return A
    scale = (in_size - 1) / (out_size - 1)
    for o in range(out_size):
        src = o * scale
        i0 = int(np.floor(src))
        i1 = min(i0 + 1, in_size - 1)
        frac = src - i0
        A[o, i0] += 1.0 - frac
        A[o, i1] += frac
    return A


def init_head_params(key, cin, cout=64, eps=1e-5):
    """Conv2d(cin, cout, 1) + BatchNorm2d(cout) folded (inference semantics)."""
    kw, kb, kg, kbe, km, kv = jax.random.split(key, 6)
    w = jax.random.normal(kw, (cin, cout), jnp.float32) * 0.02
    b = jax.random.normal(kb, (cout,), jnp.float32) * 0.02
    gamma = 1.0 + 0.1 * jax.random.normal(kg, (cout,), jnp.float32)
    beta = 0.1 * jax.random.normal(kbe, (cout,), jnp.float32)
    mean = 0.1 * jax.random.normal(km, (cout,), jnp.float32)
    var = jnp.abs(jax.random.normal(kv, (cout,), jnp.float32)) + 0.5
    scale = gamma / jnp.sqrt(var + eps)
    w_f = (w * scale[None, :]).astype(jnp.bfloat16)   # bf16 MXU operand
    b_f = (b - mean) * scale + beta                   # f32 bias (added post-accum)
    return w_f, b_f.reshape(1, cout)


def sanet_head(feat3, feat4, feat5, params):
    """feat*: NHWC backbone features. Returns pred in NCHW (N, 1, H3, W3)."""
    (w3, b3), (w4, b4), (w5, b5), (wp, bp) = params
    N, H3, W3, C3 = feat3.shape
    _, H4, W4, C4 = feat4.shape
    _, H5, W5, C5 = feat5.shape
    C = 64

    # 1x1 conv + BN + ReLU branches (bf16 matmul operands, f32 accumulation).
    out3 = conv1x1_bn_relu(
        feat3.reshape(N * H3 * W3, C3).astype(jnp.bfloat16), w3, b3,
        out_dtype=jnp.float32)                       # f32: feeds VPU products
    out4 = conv1x1_bn_relu(
        feat4.reshape(N * H4 * W4, C4).astype(jnp.bfloat16), w4, b4,
        out_dtype=jnp.bfloat16)                      # bf16: pure matmul operand
    out5 = conv1x1_bn_relu(
        feat5.reshape(N * H5 * W5, C5).astype(jnp.bfloat16), w5, b5,
        out_dtype=jnp.bfloat16)

    # Tiny separable align-corners interpolation matrices (no kron).
    mh5 = jnp.asarray(interp_matrix_align_corners(H5, H3), jnp.bfloat16)
    mw5 = jnp.asarray(interp_matrix_align_corners(W5, W3), jnp.bfloat16)
    mh4 = jnp.asarray(interp_matrix_align_corners(H4, H3), jnp.bfloat16)
    mw4 = jnp.asarray(interp_matrix_align_corners(W4, W3), jnp.bfloat16)

    # Upsample stage 1: interpolate along H (lane dim stays Win*C).
    t5 = h_upsample(out5.reshape(N, H5, W5 * C), mh5)   # (N, H3, W5*C) bf16
    t4 = h_upsample(out4.reshape(N, H4, W4 * C), mh4)   # (N, H3, W4*C) bf16

    # Upsample stage 2 (W direction) fused with the Horner-form predict conv.
    # predict weight rows in concat order [out5, out4*out5, out3*out4*out5].
    wp_rows = wp.reshape(3, C)
    pred = fused_w_upsample_predict(
        out3.reshape(N, H3, W3, C),
        t4.reshape(N, H3, W4, C),
        t5.reshape(N, H3, W5, C),
        mw4, mw5, wp_rows, bp)                          # (N, H3, W3) f32
    return pred.reshape(N, 1, H3, W3)                   # NCHW, channel dim = 1


if __name__ == "__main__":
    key = jax.random.PRNGKey(0)
    kf3, kf4, kf5, k3, k4, k5, kp = jax.random.split(key, 7)

    # Small spatial sizes, module-consistent channel counts (512/1024/2048).
    N = 2
    H3 = W3 = 8
    H4 = W4 = 4
    H5 = W5 = 2
    feat3 = jax.random.normal(kf3, (N, H3, W3, 512), jnp.float32)
    feat4 = jax.random.normal(kf4, (N, H4, W4, 1024), jnp.float32)
    feat5 = jax.random.normal(kf5, (N, H5, W5, 2048), jnp.float32)

    params = (
        init_head_params(k3, 512),    # linear3
        init_head_params(k4, 1024),   # linear4
        init_head_params(k5, 2048),   # linear5
        (jax.random.normal(kp, (192, 1), jnp.float32) * 0.02,   # predict conv
         jnp.full((1, 1), 0.01, jnp.float32)),
    )

    pred = sanet_head(feat3, feat4, feat5, params)
    jax.block_until_ready(pred)
    assert pred.shape == (N, 1, H3, W3)
    print("KERNEL_OK")
</pallas_src>

<mosaic_0001>
module attributes {stable_mosaic.version = 11 : i64} {
  func.func @_conv1x1_bn_relu_kernel(%arg0: i32, %arg1: memref<128x512xbf16, #tpu.memory_space<vmem>>, %arg2: memref<512x64xbf16, #tpu.memory_space<vmem>>, %arg3: memref<1x64xf32, #tpu.memory_space<vmem>>, %arg4: memref<128x64xf32, #tpu.memory_space<vmem>>) attributes {dimension_semantics = [#tpu.dimension_semantics<parallel>], iteration_bounds = array<i64: 1>, scalar_prefetch = 0 : i64, scratch_operands = 0 : i64, tpu.core_type = #tpu.core_type<tc>, window_params = [{transform_indices = @transform_0, window_bounds = array<i64: 128, 512>}, {pipeline_mode = #tpu.pipeline_mode<synchronous>, transform_indices = @transform_1, window_bounds = array<i64: 512, 64>}, {pipeline_mode = #tpu.pipeline_mode<synchronous>, transform_indices = @transform_2, window_bounds = array<i64: 1, 64>}, {transform_indices = @transform_3, window_bounds = array<i64: 128, 64>}]} {
    %c0 = arith.constant 0 : index
    %c0_0 = arith.constant 0 : index
    %0 = vector.load %arg1[%c0, %c0_0] : memref<128x512xbf16, #tpu.memory_space<vmem>>, vector<128x512xbf16>
    %c0_1 = arith.constant 0 : index
    %c0_2 = arith.constant 0 : index
    %1 = vector.load %arg2[%c0_1, %c0_2] : memref<512x64xbf16, #tpu.memory_space<vmem>>, vector<512x64xbf16>
    %cst = arith.constant dense<0.000000e+00> : vector<128x64xf32>
    %2 = tpu.matmul %0, %1, %cst {dimension_numbers = #tpu.dot_dimension_numbers<[1], [0], [0], [1], [0, 0, 1, 1], [], []>} : vector<128x512xbf16>, vector<512x64xbf16>, vector<128x64xf32> -> vector<128x64xf32>
    %c0_3 = arith.constant 0 : index
    %c0_4 = arith.constant 0 : index
    %3 = vector.load %arg3[%c0_3, %c0_4] : memref<1x64xf32, #tpu.memory_space<vmem>>, vector<1x64xf32>
    %4 = vector.broadcast %3 : vector<1x64xf32> to vector<128x64xf32>
    %5 = arith.addf %2, %4 : vector<128x64xf32>
    %cst_5 = arith.constant 0.000000e+00 : f32
    %6 = vector.broadcast %cst_5 : f32 to vector<128x64xf32>
    %7 = arith.maximumf %5, %6 : vector<128x64xf32>
    %c0_6 = arith.constant 0 : index
    %c0_7 = arith.constant 0 : index
    %8 = vector.load %arg4[%c0_6, %c0_7] : memref<128x64xf32, #tpu.memory_space<vmem>>, vector<128x64xf32>
    tpu.vector_store %arg4[%c0_6, %c0_7], %7 {strides = array<i32>} : memref<128x64xf32, #tpu.memory_space<vmem>>, vector<128x64xf32>,
    return
  }
  func.func @transform_0(%arg0: i32) -> (i32, i32) {
    %c0_i32 = arith.constant 0 : i32
    %c0_i32_0 = arith.constant 0 : i32
    return %arg0, %c0_i32 : i32, i32
  }
  func.func @transform_1(%arg0: i32) -> (i32, i32) {
    %c0_i32 = arith.constant 0 : i32
    %c0_i32_0 = arith.constant 0 : i32
    %c0_i32_1 = arith.constant 0 : i32
    return %c0_i32, %c0_i32_0 : i32, i32
  }
  func.func @transform_2(%arg0: i32) -> (i32, i32) {
    %c0_i32 = arith.constant 0 : i32
    %c0_i32_0 = arith.constant 0 : i32
    %c0_i32_1 = arith.constant 0 : i32
    return %c0_i32, %c0_i32_0 : i32, i32
  }
  func.func @transform_3(%arg0: i32) -> (i32, i32) {
    %c0_i32 = arith.constant 0 : i32
    %c0_i32_0 = arith.constant 0 : i32
    return %arg0, %c0_i32 : i32, i32
  }
}

</mosaic_0001>

<llo_original>
// kernel: tpu_custom_call.1
$region0: #{tpu_custom_call.1}
  #allocation0 [shape = 'u32[]', space=smem, size = 0x4, offset = 0x4, fixed_abs, tag = 'smem constant byte address 0x4 - core index']
  #allocation1 [shape = 'u32[144,128]{1,0:T(1,128)}', space=vmem, size = 0x12000, scoped, tag = 'internal scratch']
  %s0 = inlined_call_operand.vmem [shape: bf16[128,512], index: 0, kind: input, shape index: {}]
  %s1 = inlined_call_operand.vmem [shape: bf16[512,64], index: 1, kind: input, shape index: {}]
  %s2 = inlined_call_operand.vmem [shape: f32[1,64], index: 2, kind: input, shape index: {}]
  %s3 = inlined_call_operand.vmem [shape: f32[128,64], index: 3, kind: output, shape index: {}]
  %s4 = sld [smem:[#allocation0]]
  $region22: #{tpu_custom_call.1} parent=0
    _
  %s6 = ssub.s32 1, %s4
  %s7 = scalar_select 0, %s6, %s4
  // Predicated region
  $region2: #{tpu_custom_call.1} parent=0 // pred_check
    _
  $region3: #{tpu_custom_call.1} parent=0 // pred_check_branch
    %9 = sbr.rel (0) target = $region5
  $region4: #{tpu_custom_call.1} parent=0 // pred_region
    _
  $region5: #{tpu_custom_call.1} parent=0 // pred_fallthru
    _
  // Predicated region
  $region6: #{tpu_custom_call.1} parent=0 // pred_check
    _
  $region7: #{tpu_custom_call.1} parent=0 // pred_check_branch
    %11 = sbr.rel (0) target = $region9
  $region8: #{tpu_custom_call.1} parent=0 // pred_region
    _
  $region9: #{tpu_custom_call.1} parent=0 // pred_fallthru
    _
  // Predicated region
  $region10: #{tpu_custom_call.1} parent=0 // pred_check
    _
  $region11: #{tpu_custom_call.1} parent=0 // pred_check_branch
    %13 = sbr.rel (0) target = $region13
  $region12: #{tpu_custom_call.1} parent=0 // pred_region
    _
  $region13: #{tpu_custom_call.1} parent=0 // pred_fallthru
    _
  %v15 = vld [vmem:[%s0] sm:$0xff]
  %v16 = vld [vmem:[%s0 + $0x8] sm:$0xff]
  %v17 = vld [vmem:[%s0 + $0x10] sm:$0xff]
  %v18 = vld [vmem:[%s0 + $0x18] sm:$0xff]
  %v19 = vld [vmem:[%s0 + $0x20] sm:$0xff]
  %v20 = vld [vmem:[%s0 + $0x28] sm:$0xff]
  %v21 = vld [vmem:[%s0 + $0x30] sm:$0xff]
  %v22 = vld [vmem:[%s0 + $0x38] sm:$0xff]
  %v23 = vld [vmem:[%s0 + $0x40] sm:$0xff]
  %v24 = vld [vmem:[%s0 + $0x48] sm:$0xff]
  %v25 = vld [vmem:[%s0 + $0x50] sm:$0xff]
  %v26 = vld [vmem:[%s0 + $0x58] sm:$0xff]
  %v27 = vld [vmem:[%s0 + $0x60] sm:$0xff]
  %v28 = vld [vmem:[%s0 + $0x68] sm:$0xff]
  %v29 = vld [vmem:[%s0 + $0x70] sm:$0xff]
  %v30 = vld [vmem:[%s0 + $0x78] sm:$0xff]
  %v31 = vld [vmem:[%s0 + $0x80] sm:$0xff]
  %v32 = vld [vmem:[%s0 + $0x88] sm:$0xff]
  %v33 = vld [vmem:[%s0 + $0x90] sm:$0xff]
  %v34 = vld [vmem:[%s0 + $0x98] sm:$0xff]
  %v35 = vld [vmem:[%s0 + $0xa0] sm:$0xff]
  %v36 = vld [vmem:[%s0 + $0xa8] sm:$0xff]
  %v37 = vld [vmem:[%s0 + $0xb0] sm:$0xff]
  %v38 = vld [vmem:[%s0 + $0xb8] sm:$0xff]
  %v39 = vld [vmem:[%s0 + $0xc0] sm:$0xff]
  %v40 = vld [vmem:[%s0 + $0xc8] sm:$0xff]
  %v41 = vld [vmem:[%s0 + $0xd0] sm:$0xff]
  %v42 = vld [vmem:[%s0 + $0xd8] sm:$0xff]
  %v43 = vld [vmem:[%s0 + $0xe0] sm:$0xff]
  %v44 = vld [vmem:[%s0 + $0xe8] sm:$0xff]
  %v45 = vld [vmem:[%s0 + $0xf0] sm:$0xff]
  %v46 = vld [vmem:[%s0 + $0xf8] sm:$0xff]
  %v47 = vld [vmem:[%s1] sm:$0xf]
  %v48 = vld [vmem:[%s1 + $0x4] sm:$0xf]
  %v49 = vld [vmem:[%s1 + $0x8] sm:$0xf]
  %v50 = vld [vmem:[%s1 + $0xc] sm:$0xf]
  %v51 = vld [vmem:[%s1 + $0x10] sm:$0xf]
  %v52 = vld [vmem:[%s1 + $0x14] sm:$0xf]
  %v53 = vld [vmem:[%s1 + $0x18] sm:$0xf]
  %v54 = vld [vmem:[%s1 + $0x1c] sm:$0xf]
  %v55 = vld [vmem:[%s1 + $0x20] sm:$0xf]
  %v56 = vld [vmem:[%s1 + $0x24] sm:$0xf]
  %v57 = vld [vmem:[%s1 + $0x28] sm:$0xf]
  %v58 = vld [vmem:[%s1 + $0x2c] sm:$0xf]
  %v59 = vld [vmem:[%s1 + $0x30] sm:$0xf]
  %v60 = vld [vmem:[%s1 + $0x34] sm:$0xf]
  %v61 = vld [vmem:[%s1 + $0x38] sm:$0xf]
  %v62 = vld [vmem:[%s1 + $0x3c] sm:$0xf]
  %v63 = vld [vmem:[%s1 + $0x40] sm:$0xf]
  %v64 = vld [vmem:[%s1 + $0x44] sm:$0xf]
  %v65 = vld [vmem:[%s1 + $0x48] sm:$0xf]
  %v66 = vld [vmem:[%s1 + $0x4c] sm:$0xf]
  %v67 = vld [vmem:[%s1 + $0x50] sm:$0xf]
  %v68 = vld [vmem:[%s1 + $0x54] sm:$0xf]
  %v69 = vld [vmem:[%s1 + $0x58] sm:$0xf]
  %v70 = vld [vmem:[%s1 + $0x5c] sm:$0xf]
  %v71 = vld [vmem:[%s1 + $0x60] sm:$0xf]
  %v72 = vld [vmem:[%s1 + $0x64] sm:$0xf]
  %v73 = vld [vmem:[%s1 + $0x68] sm:$0xf]
  %v74 = vld [vmem:[%s1 + $0x6c] sm:$0xf]
  %v75 = vld [vmem:[%s1 + $0x70] sm:$0xf]
  %v76 = vld [vmem:[%s1 + $0x74] sm:$0xf]
  %v77 = vld [vmem:[%s1 + $0x78] sm:$0xf]
  %v78 = vld [vmem:[%s1 + $0x7c] sm:$0xf]
  %v79 = vld [vmem:[%s1 + $0x80] sm:$0xf]
  %v80 = vld [vmem:[%s1 + $0x84] sm:$0xf]
  %v81 = vld [vmem:[%s1 + $0x88] sm:$0xf]
  %v82 = vld [vmem:[%s1 + $0x8c] sm:$0xf]
  %v83 = vld [vmem:[%s1 + $0x90] sm:$0xf]
  %v84 = vld [vmem:[%s1 + $0x94] sm:$0xf]
  %v85 = vld [vmem:[%s1 + $0x98] sm:$0xf]
  %v86 = vld [vmem:[%s1 + $0x9c] sm:$0xf]
  %v87 = vld [vmem:[%s1 + $0xa0] sm:$0xf]
  %v88 = vld [vmem:[%s1 + $0xa4] sm:$0xf]
  %v89 = vld [vmem:[%s1 + $0xa8] sm:$0xf]
  %v90 = vld [vmem:[%s1 + $0xac] sm:$0xf]
  %v91 = vld [vmem:[%s1 + $0xb0] sm:$0xf]
  %v92 = vld [vmem:[%s1 + $0xb4] sm:$0xf]
  %v93 = vld [vmem:[%s1 + $0xb8] sm:$0xf]
  %v94 = vld [vmem:[%s1 + $0xbc] sm:$0xf]
  %v95 = vld [vmem:[%s1 + $0xc0] sm:$0xf]
  %v96 = vld [vmem:[%s1 + $0xc4] sm:$0xf]
  %v97 = vld [vmem:[%s1 + $0xc8] sm:$0xf]
  %v98 = vld [vmem:[%s1 + $0xcc] sm:$0xf]
  %v99 = vld [vmem:[%s1 + $0xd0] sm:$0xf]
  %v100 = vld [vmem:[%s1 + $0xd4] sm:$0xf]
  %v101 = vld [vmem:[%s1 + $0xd8] sm:$0xf]
  %v102 = vld [vmem:[%s1 + $0xdc] sm:$0xf]
  %v103 = vld [vmem:[%s1 + $0xe0] sm:$0xf]
  %v104 = vld [vmem:[%s1 + $0xe4] sm:$0xf]
  %v105 = vld [vmem:[%s1 + $0xe8] sm:$0xf]
  %v106 = vld [vmem:[%s1 + $0xec] sm:$0xf]
  %v107 = vld [vmem:[%s1 + $0xf0] sm:$0xf]
  %v108 = vld [vmem:[%s1 + $0xf4] sm:$0xf]
  %v109 = vld [vmem:[%s1 + $0xf8] sm:$0xf]
  %v110 = vld [vmem:[%s1 + $0xfc] sm:$0xf]
  %v111 = vld [vmem:[%s2] sm:$0x1]
  %v113 = vlaneseq
  %v114 = vshrl.u32 %v113, 7
  %v115 = vsub.s32 0, %v114
  %v116 = vrot.slane %v111, %v115
  %v150 = vunpack.c.l.b16 %v15
  %v151 = vunpack.c.h.b16 %v15
  %v152 = vunpack.c.l.b16 %v16
  %v153 = vunpack.c.h.b16 %v16
  %v154 = vunpack.c.l.b16 %v17
  %v155 = vunpack.c.h.b16 %v17
  %v156 = vunpack.c.l.b16 %v18
  %v157 = vunpack.c.h.b16 %v18
  %v158 = vunpack.c.l.b16 %v19
  %v159 = vunpack.c.h.b16 %v19
  %v160 = vunpack.c.l.b16 %v20
  %v161 = vunpack.c.h.b16 %v20
  %v162 = vunpack.c.l.b16 %v21
  %v163 = vunpack.c.h.b16 %v21
  %v164 = vunpack.c.l.b16 %v22
  %v165 = vunpack.c.h.b16 %v22
  %v166 = vunpack.c.l.b16 %v23
  %v167 = vunpack.c.h.b16 %v23
  %v168 = vunpack.c.l.b16 %v24
  %v169 = vunpack.c.h.b16 %v24
  %v170 = vunpack.c.l.b16 %v25
  %v171 = vunpack.c.h.b16 %v25
  %v172 = vunpack.c.l.b16 %v26
  %v173 = vunpack.c.h.b16 %v26
  %v174 = vunpack.c.l.b16 %v27
  %v175 = vunpack.c.h.b16 %v27
  %v176 = vunpack.c.l.b16 %v28
  %v177 = vunpack.c.h.b16 %v28
  %v178 = vunpack.c.l.b16 %v29
  %v179 = vunpack.c.h.b16 %v29
  %v180 = vunpack.c.l.b16 %v30
  %v181 = vunpack.c.h.b16 %v30
  %v182 = vunpack.c.l.b16 %v31
  %v183 = vunpack.c.h.b16 %v31
  %v184 = vunpack.c.l.b16 %v32
  %v185 = vunpack.c.h.b16 %v32
  %v186 = vunpack.c.l.b16 %v33
  %v187 = vunpack.c.h.b16 %v33
  %v188 = vunpack.c.l.b16 %v34
  %v189 = vunpack.c.h.b16 %v34
  %v190 = vunpack.c.l.b16 %v35
  %v191 = vunpack.c.h.b16 %v35
  %v192 = vunpack.c.l.b16 %v36
  %v193 = vunpack.c.h.b16 %v36
  %v194 = vunpack.c.l.b16 %v37
  %v195 = vunpack.c.h.b16 %v37
  %v196 = vunpack.c.l.b16 %v38
  %v197 = vunpack.c.h.b16 %v38
  %v198 = vunpack.c.l.b16 %v39
  %v199 = vunpack.c.h.b16 %v39
  %v200 = vunpack.c.l.b16 %v40
  %v201 = vunpack.c.h.b16 %v40
  %v202 = vunpack.c.l.b16 %v41
  %v203 = vunpack.c.h.b16 %v41
  %v204 = vunpack.c.l.b16 %v42
  %v205 = vunpack.c.h.b16 %v42
  %v206 = vunpack.c.l.b16 %v43
  %v207 = vunpack.c.h.b16 %v43
  %v208 = vunpack.c.l.b16 %v44
  %v209 = vunpack.c.h.b16 %v44
  %v210 = vunpack.c.l.b16 %v45
  %v211 = vunpack.c.h.b16 %v45
  %v212 = vunpack.c.l.b16 %v46
  %v213 = vunpack.c.h.b16 %v46
  %v214 = vpack.c.b16 %v154, %v150
  %v215 = vpack.c.b16 %v155, %v151
  %v216 = vpack.c.b16 %v156, %v152
  %v217 = vpack.c.b16 %v157, %v153
  %v218 = vpack.c.b16 %v162, %v158
  %v219 = vpack.c.b16 %v163, %v159
  %v220 = vpack.c.b16 %v164, %v160
  %v221 = vpack.c.b16 %v165, %v161
  %v222 = vpack.c.b16 %v170, %v166
  %v223 = vpack.c.b16 %v171, %v167
  %v224 = vpack.c.b16 %v172, %v168
  %v225 = vpack.c.b16 %v173, %v169
  %v226 = vpack.c.b16 %v178, %v174
  %v227 = vpack.c.b16 %v179, %v175
  %v228 = vpack.c.b16 %v180, %v176
  %v229 = vpack.c.b16 %v181, %v177
  %v230 = vpack.c.b16 %v186, %v182
  %v231 = vpack.c.b16 %v187, %v183
  %v232 = vpack.c.b16 %v188, %v184
  %v233 = vpack.c.b16 %v189, %v185
  %v234 = vpack.c.b16 %v194, %v190
  %v235 = vpack.c.b16 %v195, %v191
  %v236 = vpack.c.b16 %v196, %v192
  %v237 = vpack.c.b16 %v197, %v193
  %v238 = vpack.c.b16 %v202, %v198
  %v239 = vpack.c.b16 %v203, %v199
  %v240 = vpack.c.b16 %v204, %v200
  %v241 = vpack.c.b16 %v205, %v201
  %v242 = vpack.c.b16 %v210, %v206
  %v243 = vpack.c.b16 %v211, %v207
  %v244 = vpack.c.b16 %v212, %v208
  %v245 = vpack.c.b16 %v213, %v209
  %v342 = vunpack.c.l.b16 %v47
  %v343 = vunpack.c.l.b16 %v48
  %v344 = vunpack.c.l.b16 %v49
  %v345 = vunpack.c.l.b16 %v50
  %v346 = vunpack.c.l.b16 %v51
  %v347 = vunpack.c.l.b16 %v52
  %v348 = vunpack.c.l.b16 %v53
  %v349 = vunpack.c.l.b16 %v54
  %v350 = vunpack.c.l.b16 %v55
  %v351 = vunpack.c.l.b16 %v56
  %v352 = vunpack.c.l.b16 %v57
  %v353 = vunpack.c.l.b16 %v58
  %v354 = vunpack.c.l.b16 %v59
  %v355 = vunpack.c.l.b16 %v60
  %v356 = vunpack.c.l.b16 %v61
  %v357 = vunpack.c.l.b16 %v62
  %v358 = vunpack.c.l.b16 %v63
  %v359 = vunpack.c.l.b16 %v64
  %v360 = vunpack.c.l.b16 %v65
  %v361 = vunpack.c.l.b16 %v66
  %v362 = vunpack.c.l.b16 %v67
  %v363 = vunpack.c.l.b16 %v68
  %v364 = vunpack.c.l.b16 %v69
  %v365 = vunpack.c.l.b16 %v70
  %v366 = vunpack.c.l.b16 %v71
  %v367 = vunpack.c.l.b16 %v72
  %v368 = vunpack.c.l.b16 %v73
  %v369 = vunpack.c.l.b16 %v74
  %v370 = vunpack.c.l.b16 %v75
  %v371 = vunpack.c.l.b16 %v76
  %v372 = vunpack.c.l.b16 %v77
  %v373 = vunpack.c.l.b16 %v78
  %v374 = vunpack.c.l.b16 %v79
  %v375 = vunpack.c.l.b16 %v80
  %v376 = vunpack.c.l.b16 %v81
  %v377 = vunpack.c.l.b16 %v82
  %v378 = vunpack.c.l.b16 %v83
  %v379 = vunpack.c.l.b16 %v84
  %v380 = vunpack.c.l.b16 %v85
  %v381 = vunpack.c.l.b16 %v86
  %v382 = vunpack.c.l.b16 %v87
  %v383 = vunpack.c.l.b16 %v88
  %v384 = vunpack.c.l.b16 %v89
  %v385 = vunpack.c.l.b16 %v90
  %v386 = vunpack.c.l.b16 %v91
  %v387 = vunpack.c.l.b16 %v92
  %v388 = vunpack.c.l.b16 %v93
  %v389 = vunpack.c.l.b16 %v94
  %v390 = vunpack.c.l.b16 %v95
  %v391 = vunpack.c.l.b16 %v96
  %v392 = vunpack.c.l.b16 %v97
  %v393 = vunpack.c.l.b16 %v98
  %v394 = vunpack.c.l.b16 %v99
  %v395 = vunpack.c.l.b16 %v100
  %v396 = vunpack.c.l.b16 %v101
  %v397 = vunpack.c.l.b16 %v102
  %v398 = vunpack.c.l.b16 %v103
  %v399 = vunpack.c.l.b16 %v104
  %v400 = vunpack.c.l.b16 %v105
  %v401 = vunpack.c.l.b16 %v106
  %v402 = vunpack.c.l.b16 %v107
  %v403 = vunpack.c.l.b16 %v108
  %v404 = vunpack.c.l.b16 %v109
  %v405 = vunpack.c.l.b16 %v110
  %v406 = vpack.c.b16 %v343, %v342
  %v407 = vpack.c.b16 %v345, %v344
  %v408 = vpack.c.b16 %v347, %v346
  %v409 = vpack.c.b16 %v349, %v348
  %v410 = vpack.c.b16 %v351, %v350
  %v411 = vpack.c.b16 %v353, %v352
  %v412 = vpack.c.b16 %v355, %v354
  %v413 = vpack.c.b16 %v357, %v356
  %v414 = vpack.c.b16 %v359, %v358
  %v415 = vpack.c.b16 %v361, %v360
  %v416 = vpack.c.b16 %v363, %v362
  %v417 = vpack.c.b16 %v365, %v364
  %v418 = vpack.c.b16 %v367, %v366
  %v419 = vpack.c.b16 %v369, %v368
  %v420 = vpack.c.b16 %v371, %v370
  %v421 = vpack.c.b16 %v373, %v372
  %v422 = vpack.c.b16 %v375, %v374
  %v423 = vpack.c.b16 %v377, %v376
  %v424 = vpack.c.b16 %v379, %v378
  %v425 = vpack.c.b16 %v381, %v380
  %v426 = vpack.c.b16 %v383, %v382
  %v427 = vpack.c.b16 %v385, %v384
  %v428 = vpack.c.b16 %v387, %v386
  %v429 = vpack.c.b16 %v389, %v388
  %v430 = vpack.c.b16 %v391, %v390
  %v431 = vpack.c.b16 %v393, %v392
  %v432 = vpack.c.b16 %v395, %v394
  %v433 = vpack.c.b16 %v397, %v396
  %v434 = vpack.c.b16 %v399, %v398
  %v435 = vpack.c.b16 %v401, %v400
  %v436 = vpack.c.b16 %v403, %v402
  %v437 = vpack.c.b16 %v405, %v404
  %470 = vmatprep.subr.bf16.mxu0 0
  %471 = vmatpush1.bf16.msra.mxu0 %v406
  %472 = vmatprep.subr.bf16.mxu0 0
  %473 = vmatpush1.bf16.msra.mxu0 %v407
  %474 = vmatprep.subr.bf16.mxu0 0
  %475 = vmatpush1.bf16.msra.mxu0 %v408
  %476 = vmatprep.subr.bf16.mxu0 0
  %477 = vmatpush1.bf16.msra.mxu0 %v409
  %478 = vmatprep.subr.bf16.mxu0 0
  %479 = vmatpush1.bf16.msra.mxu0 %v410
  %480 = vmatprep.subr.bf16.mxu0 0
  %481 = vmatpush1.bf16.msra.mxu0 %v411
  %482 = vmatprep.subr.bf16.mxu0 0
  %483 = vmatpush1.bf16.msra.mxu0 %v412
  %484 = vmatprep.subr.bf16.mxu0 0
  %485 = vmatpush1.bf16.msra.mxu0 %v413
  %486 = vmatprep.subr.bf16.mxu0 0
  %487 = vmatpush1.bf16.msra.mxu0 %v414
  %488 = vmatprep.subr.bf16.mxu0 0
  %489 = vmatpush1.bf16.msra.mxu0 %v415
  %490 = vmatprep.subr.bf16.mxu0 0
  %491 = vmatpush1.bf16.msra.mxu0 %v416
  %492 = vmatprep.subr.bf16.mxu0 0
  %493 = vmatpush1.bf16.msra.mxu0 %v417
  %494 = vmatprep.subr.bf16.mxu0 0
  %495 = vmatpush1.bf16.msra.mxu0 %v418
  %496 = vmatprep.subr.bf16.mxu0 0
  %497 = vmatpush1.bf16.msra.mxu0 %v419
  %498 = vmatprep.subr.bf16.mxu0 0
  %499 = vmatpush1.bf16.msra.mxu0 %v420
  %500 = vmatprep.subr.bf16.mxu0 0
  %501 = vmatpush1.bf16.msra.mxu0 %v421
  %502 = vmatprep.mubr.bf16.mxu0 %v215
  %503 = vmatmul.mubr.bf16.gmra.mrb[0].mxu0 %v214
  %v504 = vpop.f32.mrb[0].mxu0
  %v505 = vadd.f32 %v116, %v504
  %v506 = vpop.f32.mrb[0].mxu0
  %v507 = vpop.f32.mrb[0].mxu0
  %v508 = vadd.f32 %v116, %v507
  %v509 = vpop.f32.mrb[0].mxu0
  %510 = vmatprep.mubr.bf16.mxu0 %v219
  %511 = vmatmul.mubr.bf16.gmra.mrb[0].mxu0 %v218
  %v512 = vpop.f32.mrb[0].mxu0
  %v513 = vadd.f32 %v116, %v512
  %v514 = vpop.f32.mrb[0].mxu0
  %v515 = vpop.f32.mrb[0].mxu0
  %v516 = vadd.f32 %v116, %v515
  %v517 = vpop.f32.mrb[0].mxu0
  %518 = vmatprep.mubr.bf16.mxu0 %v223
  %519 = vmatmul.mubr.bf16.gmra.mrb[0].mxu0 %v222
  %v520 = vpop.f32.mrb[0].mxu0
  %v521 = vadd.f32 %v116, %v520
  %v522 = vpop.f32.mrb[0].mxu0
  %v523 = vpop.f32.mrb[0].mxu0
  %v524 = vadd.f32 %v116, %v523
  %v525 = vpop.f32.mrb[0].mxu0
  %526 = vmatprep.mubr.bf16.mxu0 %v227
  %527 = vmatmul.mubr.bf16.gmra.mrb[0].mxu0 %v226
  %v528 = vpop.f32.mrb[0].mxu0
  %v529 = vadd.f32 %v116, %v528
  %v530 = vpop.f32.mrb[0].mxu0
  %v531 = vpop.f32.mrb[0].mxu0
  %v532 = vadd.f32 %v116, %v531
  %v533 = vpop.f32.mrb[0].mxu0
  %534 = vmatprep.mubr.bf16.mxu0 %v231
  %535 = vmatmul.mubr.bf16.gmra.mrb[0].mxu0 %v230
  %v536 = vpop.f32.mrb[0].mxu0
  %v537 = vadd.f32 %v116, %v536
  %v538 = vpop.f32.mrb[0].mxu0
  %v539 = vpop.f32.mrb[0].mxu0
  %v540 = vadd.f32 %v116, %v539
  %v541 = vpop.f32.mrb[0].mxu0
  %542 = vmatprep.mubr.bf16.mxu0 %v235
  %543 = vmatmul.mubr.bf16.gmra.mrb[0].mxu0 %v234
  %v544 = vpop.f32.mrb[0].mxu0
  %v545 = vadd.f32 %v116, %v544
  %v546 = vpop.f32.mrb[0].mxu0
  %v547 = vpop.f32.mrb[0].mxu0
  %v548 = vadd.f32 %v116, %v547
  %v549 = vpop.f32.mrb[0].mxu0
  %550 = vmatprep.mubr.bf16.mxu0 %v239
  %551 = vmatmul.mubr.bf16.gmra.mrb[0].mxu0 %v238
  %v552 = vpop.f32.mrb[0].mxu0
  %v553 = vadd.f32 %v116, %v552
  %v554 = vpop.f32.mrb[0].mxu0
  %v555 = vpop.f32.mrb[0].mxu0
  %v556 = vadd.f32 %v116, %v555
  %v557 = vpop.f32.mrb[0].mxu0
  %558 = vmatprep.mubr.bf16.mxu0 %v243
  %559 = vmatmul.mubr.bf16.gmra.mrb[0].mxu0 %v242
  %v560 = vpop.f32.mrb[0].mxu0
  %v561 = vadd.f32 %v116, %v560
  %v562 = vpop.f32.mrb[0].mxu0
  %v563 = vpop.f32.mrb[0].mxu0
  %v564 = vadd.f32 %v116, %v563
  %v565 = vpop.f32.mrb[0].mxu0
  %566 = vdwg.mxu0
  %567 = vmatprep.subr.bf16.mxu0 0
  %568 = vmatpush1.bf16.msra.mxu0 %v422
  %569 = vmatprep.subr.bf16.mxu0 0
  %570 = vmatpush1.bf16.msra.mxu0 %v423
  %571 = vmatprep.subr.bf16.mxu0 0
  %572 = vmatpush1.bf16.msra.mxu0 %v424
  %573 = vmatprep.subr.bf16.mxu0 0
  %574 = vmatpush1.bf16.msra.mxu0 %v425
  %575 = vmatprep.subr.bf16.mxu0 0
  %576 = vmatpush1.bf16.msra.mxu0 %v426
  %577 = vmatprep.subr.bf16.mxu0 0
  %578 = vmatpush1.bf16.msra.mxu0 %v427
  %579 = vmatprep.subr.bf16.mxu0 0
  %580 = vmatpush1.bf16.msra.mxu0 %v428
  %581 = vmatprep.subr.bf16.mxu0 0
  %582 = vmatpush1.bf16.msra.mxu0 %v429
  %583 = vmatprep.subr.bf16.mxu0 0
  %584 = vmatpush1.bf16.msra.mxu0 %v430
  %585 = vmatprep.subr.bf16.mxu0 0
  %586 = vmatpush1.bf16.msra.mxu0 %v431
  %587 = vmatprep.subr.bf16.mxu0 0
  %588 = vmatpush1.bf16.msra.mxu0 %v432
  %589 = vmatprep.subr.bf16.mxu0 0
  %590 = vmatpush1.bf16.msra.mxu0 %v433
  %591 = vmatprep.subr.bf16.mxu0 0
  %592 = vmatpush1.bf16.msra.mxu0 %v434
  %593 = vmatprep.subr.bf16.mxu0 0
  %594 = vmatpush1.bf16.msra.mxu0 %v435
  %595 = vmatprep.subr.bf16.mxu0 0
  %596 = vmatpush1.bf16.msra.mxu0 %v436
  %597 = vmatprep.subr.bf16.mxu0 0
  %598 = vmatpush1.bf16.msra.mxu0 %v437
  %599 = vmatprep.mubr.bf16.mxu0 %v217
  %600 = vmatmul.mubr.bf16.gmra.mrb[0].mxu0 %v216
  %v601 = vpop.f32.mrb[0].mxu0
  %v602 = vadd.f32 %v505, %v601
  %v603 = vpop.f32.mrb[0].mxu0
  %v604 = vpop.f32.mrb[0].mxu0
  %v605 = vadd.f32 %v508, %v604
  %v606 = vpop.f32.mrb[0].mxu0
  %607 = vmatprep.mubr.bf16.mxu0 %v221
  %608 = vmatmul.mubr.bf16.gmra.mrb[0].mxu0 %v220
  %v609 = vpop.f32.mrb[0].mxu0
  %v610 = vadd.f32 %v513, %v609
  %v611 = vpop.f32.mrb[0].mxu0
  %v612 = vpop.f32.mrb[0].mxu0
  %v613 = vadd.f32 %v516, %v612
  %v614 = vpop.f32.mrb[0].mxu0
  %615 = vmatprep.mubr.bf16.mxu0 %v225
  %616 = vmatmul.mubr.bf16.gmra.mrb[0].mxu0 %v224
  %v617 = vpop.f32.mrb[0].mxu0
  %v618 = vadd.f32 %v521, %v617
  %v619 = vpop.f32.mrb[0].mxu0
  %v620 = vpop.f32.mrb[0].mxu0
  %v621 = vadd.f32 %v524, %v620
  %v622 = vpop.f32.mrb[0].mxu0
  %623 = vmatprep.mubr.bf16.mxu0 %v229
  %624 = vmatmul.mubr.bf16.gmra.mrb[0].mxu0 %v228
  %v625 = vpop.f32.mrb[0].mxu0
  %v626 = vadd.f32 %v529, %v625
  %v627 = vpop.f32.mrb[0].mxu0
  %v628 = vpop.f32.mrb[0].mxu0
  %v629 = vadd.f32 %v532, %v628
  %v630 = vpop.f32.mrb[0].mxu0
  %631 = vmatprep.mubr.bf16.mxu0 %v233
  %632 = vmatmul.mubr.bf16.gmra.mrb[0].mxu0 %v232
  %v633 = vpop.f32.mrb[0].mxu0
  %v634 = vadd.f32 %v537, %v633
  %v635 = vpop.f32.mrb[0].mxu0
  %v636 = vpop.f32.mrb[0].mxu0
  %v637 = vadd.f32 %v540, %v636
  %v638 = vpop.f32.mrb[0].mxu0
  %639 = vmatprep.mubr.bf16.mxu0 %v237
  %640 = vmatmul.mubr.bf16.gmra.mrb[0].mxu0 %v236
  %v641 = vpop.f32.mrb[0].mxu0
  %v642 = vadd.f32 %v545, %v641
  %v643 = vpop.f32.mrb[0].mxu0
  %v644 = vpop.f32.mrb[0].mxu0
  %v645 = vadd.f32 %v548, %v644
  %v646 = vpop.f32.mrb[0].mxu0
  %647 = vmatprep.mubr.bf16.mxu0 %v241
  %648 = vmatmul.mubr.bf16.gmra.mrb[0].mxu0 %v240
  %v649 = vpop.f32.mrb[0].mxu0
  %v650 = vadd.f32 %v553, %v649
  %v651 = vpop.f32.mrb[0].mxu0
  %v652 = vpop.f32.mrb[0].mxu0
  %v653 = vadd.f32 %v556, %v652
  %v654 = vpop.f32.mrb[0].mxu0
  %655 = vmatprep.mubr.bf16.mxu0 %v245
  %656 = vmatmul.mubr.bf16.gmra.mrb[0].mxu0 %v244
  %v657 = vpop.f32.mrb[0].mxu0
  %v658 = vadd.f32 %v561, %v657
  %v659 = vpop.f32.mrb[0].mxu0
  %v660 = vpop.f32.mrb[0].mxu0
  %v661 = vadd.f32 %v564, %v660
  %v662 = vpop.f32.mrb[0].mxu0
  %663 = vdwg.mxu0
  %v664 = vmax.f32 %v602, 0.0
  %v665 = vmax.f32 %v605, 0.0
  %v666 = vmax.f32 %v610, 0.0
  %v667 = vmax.f32 %v613, 0.0
  %v668 = vmax.f32 %v618, 0.0
  %v669 = vmax.f32 %v621, 0.0
  %v670 = vmax.f32 %v626, 0.0
  %v671 = vmax.f32 %v629, 0.0
  %v672 = vmax.f32 %v634, 0.0
  %v673 = vmax.f32 %v637, 0.0
  %v674 = vmax.f32 %v642, 0.0
  %v675 = vmax.f32 %v645, 0.0
  %v676 = vmax.f32 %v650, 0.0
  %v677 = vmax.f32 %v653, 0.0
  %v678 = vmax.f32 %v658, 0.0
  %v679 = vmax.f32 %v661, 0.0
  %vm680 = vcmask 523264
  %681 = vst.msk [vmem:[%s3] sm:$0xff] %vm680, %v664
  %682 = vst.msk [vmem:[%s3 + $0x8] sm:$0xff] %vm680, %v665
  %683 = vst.msk [vmem:[%s3 + $0x10] sm:$0xff] %vm680, %v666
  %684 = vst.msk [vmem:[%s3 + $0x18] sm:$0xff] %vm680, %v667
  %685 = vst.msk [vmem:[%s3 + $0x20] sm:$0xff] %vm680, %v668
  %686 = vst.msk [vmem:[%s3 + $0x28] sm:$0xff] %vm680, %v669
  %687 = vst.msk [vmem:[%s3 + $0x30] sm:$0xff] %vm680, %v670
  %688 = vst.msk [vmem:[%s3 + $0x38] sm:$0xff] %vm680, %v671
  %689 = vst.msk [vmem:[%s3 + $0x40] sm:$0xff] %vm680, %v672
  %690 = vst.msk [vmem:[%s3 + $0x48] sm:$0xff] %vm680, %v673
  %691 = vst.msk [vmem:[%s3 + $0x50] sm:$0xff] %vm680, %v674
  %692 = vst.msk [vmem:[%s3 + $0x58] sm:$0xff] %vm680, %v675
  %693 = vst.msk [vmem:[%s3 + $0x60] sm:$0xff] %vm680, %v676
  %694 = vst.msk [vmem:[%s3 + $0x68] sm:$0xff] %vm680, %v677
  %695 = vst.msk [vmem:[%s3 + $0x70] sm:$0xff] %vm680, %v678
  %696 = vst.msk [vmem:[%s3 + $0x78] sm:$0xff] %vm680, %v679
  // Predicated region
  $region14: #{tpu_custom_call.1} parent=0 // pred_check
    _
  $region15: #{tpu_custom_call.1} parent=0 // pred_check_branch
    %698 = sbr.rel (0) target = $region17
  $region16: #{tpu_custom_call.1} parent=0 // pred_region
    _
  $region17: #{tpu_custom_call.1} parent=0 // pred_fallthru
    _
  // Predicated region
  $region18: #{tpu_custom_call.1} parent=0 // pred_check
    _
  $region19: #{tpu_custom_call.1} parent=0 // pred_check_branch
    %700 = sbr.rel (0) target = $region21
  $region20: #{tpu_custom_call.1} parent=0 // pred_region
    _
  $region21: #{tpu_custom_call.1} parent=0 // pred_fallthru
    _

</llo_original>
